<compile_context>
chip_gen: v7x
topology: tpu7x:2x2x1
jax: 0.10.0
libtpu: 0.0.40
codegen_flags: <defaults>
</compile_context>

<pallas_src>
import numpy as np

import jax
import jax.numpy as jnp
from jax.experimental import pallas as pl
from jax.experimental.pallas import tpu as pltpu

EPS = 1e-5          # nn.InstanceNorm3d default eps
NEG_SLOPE = 0.2     # LeakyReLU negative slope

# Taps in row-major (kh, kw) order: t = (a+1)*3 + (b+1).
TAPS = tuple((a, b) for a in (-1, 0, 1) for b in (-1, 0, 1))


def _instance_norm_lrelu(v):
    """InstanceNorm3d(affine=False, eps=1e-5, biased var) + LeakyReLU(0.2), f32.

    `centered` is computed once and reused; since rsqrt(var+eps) > 0, the
    normalization scale is folded into the LeakyReLU select (one select + one
    multiply on the (C, S) tile instead of sub/mul/cmp/mul/select).
    """
    centered = v - jnp.mean(v, axis=1, keepdims=True)
    var = jnp.mean(centered * centered, axis=1, keepdims=True)
    scale = jax.lax.rsqrt(var + EPS)                    # EUP, per-channel (C,1)
    return centered * jnp.where(centered > 0, scale, NEG_SLOPE * scale)


# ------------------------------- fused kernel -------------------------------
def _make_fused_kernel(H, W, Z):
    S = H * W * Z

    def kernel(x_ref, masks_ref, w1_ref, b1_ref, w2_ref, b2_ref, w3_ref,
               b3_ref, o_ref):
        # ---- block 1: IN + LReLU + 1x1x1 conv (3C -> C) --------------------
        h = _instance_norm_lrelu(x_ref[0])                          # (3C, S) f32
        y = jnp.dot(w1_ref[...], h.astype(jnp.bfloat16),
                    preferred_element_type=jnp.float32) + b1_ref[...]  # (C, S)

        # ---- block 2: IN + LReLU + (3,3,1) conv, zero pad (1,1,0) ----------
        # Single stacked matmul: (C, 9C) @ (9C, S).
        h = _instance_norm_lrelu(y)                                 # (C, S) f32
        parts = []
        for t, (a, b) in enumerate(TAPS):
            off = (a * W + b) * Z   # flat-S offset of neighbour (h+a, w+b, z)
            # pltpu.roll follows the jnp.roll convention:
            #   roll(x, shift)[s] == x[(s - shift) % S]
            # so shift = (-off) % S gives src[:, s] == h[:, (s + off) % S].
            src = h if off == 0 else pltpu.roll(h, (-off) % S, axis=1)
            if a != 0 or b != 0:
                # Precomputed 0/1 border mask for this tap (zero padding).
                src = src * masks_ref[pl.ds(t, 1), :]
            parts.append(src.astype(jnp.bfloat16))
        stacked = jnp.concatenate(parts, axis=0)                    # (9C, S) bf16
        y = jnp.dot(w2_ref[...], stacked,
                    preferred_element_type=jnp.float32) + b2_ref[...]

        # ---- block 3: IN + LReLU + 1x1x1 conv (C -> C) ---------------------
        h = _instance_norm_lrelu(y)
        o_ref[0] = jnp.dot(w3_ref[...], h.astype(jnp.bfloat16),
                           preferred_element_type=jnp.float32) + b3_ref[...]

    return kernel


# ----------------------------- host-side helpers -----------------------------
def _border_masks(H, W, Z):
    """(9, S) f32 0/1 masks: mask[t, s] == 1 iff output position s has a valid
    (in-bounds) neighbour for tap t; computed once on the host, never in-kernel."""
    S = H * W * Z
    s = np.arange(S)
    row = s // (W * Z)
    col = (s // Z) % W
    masks = np.ones((9, S), np.float32)
    for t, (a, b) in enumerate(TAPS):
        valid = np.ones(S, bool)
        if a == -1:
            valid &= row >= 1
        elif a == 1:
            valid &= row <= H - 2
        if b == -1:
            valid &= col >= 1
        elif b == 1:
            valid &= col <= W - 2
        masks[t] = valid
    return jnp.asarray(masks)


def _vmem_limit_bytes(Ct, C, S):
    """Explicit scoped-VMEM request with headroom (defaults are 16-32 MiB)."""
    est = 4 * S * (2 * Ct + 2 * C)        # double-buffered f32 in/out blocks
    est += 4 * S * (Ct + 3 * C)           # f32 activations / rolled taps
    est += 2 * S * (9 * C + Ct + C)       # bf16 stacked source + casts
    est += 4 * 9 * S + 256 * 1024         # masks, weights, biases, slack
    return int(min(100 * (1 << 20), max(32 * (1 << 20), 2 * est)))


# --------------------------------- wrapper ----------------------------------
def fusion_prenorm_2d_forward(params, x):
    """x: (B, num_modals*C, H, W, Z) f32  ->  (B, C, H, W, Z) f32."""
    B, Ct, H, W, Z = x.shape
    C = params["w3"].shape[0]
    S = H * W * Z

    # bf16 MXU operands. Block-2 weights are pre-stacked to (C, 9C) matching
    # the tap order of the (9C, S) stacked source built inside the kernel.
    w1 = params["w1"].astype(jnp.bfloat16)                              # (C, 3C)
    w2s = jnp.transpose(params["w2"], (1, 0, 2)).reshape(C, 9 * C)
    w2s = w2s.astype(jnp.bfloat16)                                      # (C, 9C)
    w3 = params["w3"].astype(jnp.bfloat16)                              # (C, C)
    masks = _border_masks(H, W, Z)                                      # (9, S)

    kernel = _make_fused_kernel(H, W, Z)
    flops = 2 * B * S * (Ct * C + 9 * C * C + C * C)
    bytes_accessed = (4 * B * S * (Ct + C)
                      + 2 * (Ct * C + 9 * C * C + C * C)
                      + 4 * (3 * C + 9 * S))

    out = pl.pallas_call(
        kernel,
        out_shape=jax.ShapeDtypeStruct((B, C, S), jnp.float32),
        grid=(B,),
        in_specs=[
            pl.BlockSpec((1, Ct, S), lambda i: (i, 0, 0)),   # activations
            pl.BlockSpec((9, S), lambda i: (0, 0)),          # border masks
            pl.BlockSpec((C, Ct), lambda i: (0, 0)),         # w1 (bf16)
            pl.BlockSpec((C, 1), lambda i: (0, 0)),          # b1
            pl.BlockSpec((C, 9 * C), lambda i: (0, 0)),      # w2 stacked (bf16)
            pl.BlockSpec((C, 1), lambda i: (0, 0)),          # b2
            pl.BlockSpec((C, C), lambda i: (0, 0)),          # w3 (bf16)
            pl.BlockSpec((C, 1), lambda i: (0, 0)),          # b3
        ],
        out_specs=pl.BlockSpec((1, C, S), lambda i: (i, 0, 0)),
        compiler_params=pltpu.CompilerParams(
            dimension_semantics=("parallel",),
            vmem_limit_bytes=_vmem_limit_bytes(Ct, C, S)),
        cost_estimate=pl.CostEstimate(
            flops=flops, transcendentals=B * (Ct + 2 * C),
            bytes_accessed=bytes_accessed),
    )(x.reshape(B, Ct, S), masks, w1, params["b1"], w2s, params["b2"],
      w3, params["b3"])
    return out.reshape(B, C, H, W, Z)


# ----------------------------- params / reference ---------------------------
def init_params(key, in_channel, num_modals):
    # Weight layouts (mapping from the torch module):
    #   w1    = conv1.weight[:, :, 0, 0, 0]              (C, num_modals*C)
    #   w2[t] = conv2.weight[:, :, t // 3, t % 3, 0]     (9, C, C), taps row-major
    #   w3    = conv3.weight[:, :, 0, 0, 0]              (C, C)
    #   b*    = conv*.bias[:, None]                      (C, 1)
    C = in_channel
    Ct = in_channel * num_modals
    ks = jax.random.split(key, 6)

    def w(k, shape, scale=0.1):
        return scale * jax.random.normal(k, shape, jnp.float32)

    return {
        "w1": w(ks[0], (C, Ct)), "b1": w(ks[1], (C, 1)),
        "w2": w(ks[2], (9, C, C)), "b2": w(ks[3], (C, 1)),
        "w3": w(ks[4], (C, C)), "b3": w(ks[5], (C, 1)),
    }


def reference_forward(params, x):
    # Pure-JAX f32 reference (matches the torch module) used to validate.
    B, Ct, H, W, Z = x.shape

    def in_lrelu(v):
        mean = v.mean(axis=(2, 3, 4), keepdims=True)
        var = jnp.square(v - mean).mean(axis=(2, 3, 4), keepdims=True)
        vn = (v - mean) * jax.lax.rsqrt(var + EPS)
        return jnp.where(vn > 0, vn, NEG_SLOPE * vn)

    h = in_lrelu(x)
    y = jnp.einsum("oc,bchwz->bohwz", params["w1"], h) \
        + params["b1"].reshape(1, -1, 1, 1, 1)
    h = in_lrelu(y)
    hp = jnp.pad(h, ((0, 0), (0, 0), (1, 1), (1, 1), (0, 0)))
    acc = 0.0
    for t, (a, b) in enumerate(TAPS):
        sh = hp[:, :, 1 + a:1 + a + H, 1 + b:1 + b + W, :]
        acc = acc + jnp.einsum("oc,bchwz->bohwz", params["w2"][t], sh)
    y = acc + params["b2"].reshape(1, -1, 1, 1, 1)
    h = in_lrelu(y)
    y = jnp.einsum("oc,bchwz->bohwz", params["w3"], h) \
        + params["b3"].reshape(1, -1, 1, 1, 1)
    return y


# ----------------------------------- main ------------------------------------
if __name__ == "__main__":
    in_channel, num_modals = 16, 3
    B, H, W, Z = 2, 8, 8, 4        # S = 256 (multiple of 128 -> lane-dense)

    key = jax.random.PRNGKey(0)
    kx, kp = jax.random.split(key)
    x = jax.random.normal(kx, (B, in_channel * num_modals, H, W, Z), jnp.float32)
    params = init_params(kp, in_channel, num_modals)

    out = fusion_prenorm_2d_forward(params, x)
    out = jax.block_until_ready(out)
    assert out.shape == (B, in_channel, H, W, Z), out.shape

    ref = reference_forward(params, x)
    max_err = float(jnp.max(jnp.abs(out - ref)))
    # bf16 MXU operands (f32 accumulation, f32 norm statistics) vs f32 reference.
    assert max_err < 4e-2, f"max abs error vs reference: {max_err}"
    print("KERNEL_OK")
</pallas_src>

<mosaic_0001>
module attributes {stable_mosaic.version = 11 : i64} {
  func.func @kernel(%arg0: i32, %arg1: memref<1x48x256xf32, #tpu.memory_space<vmem>>, %arg2: memref<9x256xf32, #tpu.memory_space<vmem>>, %arg3: memref<16x48xbf16, #tpu.memory_space<vmem>>, %arg4: memref<16x1xf32, #tpu.memory_space<vmem>>, %arg5: memref<16x144xbf16, #tpu.memory_space<vmem>>, %arg6: memref<16x1xf32, #tpu.memory_space<vmem>>, %arg7: memref<16x16xbf16, #tpu.memory_space<vmem>>, %arg8: memref<16x1xf32, #tpu.memory_space<vmem>>, %arg9: memref<1x16x256xf32, #tpu.memory_space<vmem>>) attributes {dimension_semantics = [#tpu.dimension_semantics<parallel>], iteration_bounds = array<i64: 2>, scalar_prefetch = 0 : i64, scratch_operands = 0 : i64, tpu.core_type = #tpu.core_type<tc>, window_params = [{transform_indices = @transform_0, window_bounds = array<i64: 1, 48, 256>}, {pipeline_mode = #tpu.pipeline_mode<synchronous>, transform_indices = @transform_1, window_bounds = array<i64: 9, 256>}, {pipeline_mode = #tpu.pipeline_mode<synchronous>, transform_indices = @transform_2, window_bounds = array<i64: 16, 48>}, {pipeline_mode = #tpu.pipeline_mode<synchronous>, transform_indices = @transform_3, window_bounds = array<i64: 16, 1>}, {pipeline_mode = #tpu.pipeline_mode<synchronous>, transform_indices = @transform_4, window_bounds = array<i64: 16, 144>}, {pipeline_mode = #tpu.pipeline_mode<synchronous>, transform_indices = @transform_5, window_bounds = array<i64: 16, 1>}, {pipeline_mode = #tpu.pipeline_mode<synchronous>, transform_indices = @transform_6, window_bounds = array<i64: 16, 16>}, {pipeline_mode = #tpu.pipeline_mode<synchronous>, transform_indices = @transform_7, window_bounds = array<i64: 16, 1>}, {transform_indices = @transform_8, window_bounds = array<i64: 1, 16, 256>}]} {
    %c0 = arith.constant 0 : index
    %c0_0 = arith.constant 0 : index
    %c0_1 = arith.constant 0 : index
    %0 = vector.load %arg1[%c0, %c0_0, %c0_1] : memref<1x48x256xf32, #tpu.memory_space<vmem>>, vector<1x48x256xf32>
    %1 = vector.shape_cast %0 : vector<1x48x256xf32> to vector<48x256xf32>
    %cst = arith.constant dense<0.000000e+00> : vector<48xf32>
    %2 = vector.multi_reduction <add>, %1, %cst [1] : vector<48x256xf32> to vector<48xf32>
    %3 = vector.shape_cast %2 : vector<48xf32> to vector<48x1xf32>
    %cst_2 = arith.constant 2.560000e+02 : f32
    %4 = vector.broadcast %cst_2 : f32 to vector<48x1xf32>
    %5 = arith.divf %3, %4 : vector<48x1xf32>
    %6 = vector.broadcast %5 : vector<48x1xf32> to vector<48x256xf32>
    %7 = arith.subf %1, %6 : vector<48x256xf32>
    %8 = arith.mulf %7, %7 : vector<48x256xf32>
    %cst_3 = arith.constant dense<0.000000e+00> : vector<48xf32>
    %9 = vector.multi_reduction <add>, %8, %cst_3 [1] : vector<48x256xf32> to vector<48xf32>
    %10 = vector.shape_cast %9 : vector<48xf32> to vector<48x1xf32>
    %cst_4 = arith.constant 2.560000e+02 : f32
    %11 = vector.broadcast %cst_4 : f32 to vector<48x1xf32>
    %12 = arith.divf %10, %11 : vector<48x1xf32>
    %cst_5 = arith.constant 9.99999974E-6 : f32
    %13 = vector.broadcast %cst_5 : f32 to vector<48x1xf32>
    %14 = arith.addf %12, %13 : vector<48x1xf32>
    %15 = math.rsqrt %14 : vector<48x1xf32>
    %cst_6 = arith.constant 0.000000e+00 : f32
    %16 = vector.broadcast %cst_6 : f32 to vector<48x256xf32>
    %17 = arith.cmpf ogt, %7, %16 : vector<48x256xf32>
    %cst_7 = arith.constant 2.000000e-01 : f32
    %18 = vector.broadcast %cst_7 : f32 to vector<48x1xf32>
    %19 = arith.mulf %18, %15 : vector<48x1xf32>
    %20 = vector.shape_cast %15 : vector<48x1xf32> to vector<48x1xf32>
    %21 = vector.broadcast %20 : vector<48x1xf32> to vector<48x256xf32>
    %22 = vector.shape_cast %19 : vector<48x1xf32> to vector<48x1xf32>
    %23 = vector.broadcast %22 : vector<48x1xf32> to vector<48x256xf32>
    %24 = arith.select %17, %21, %23 : vector<48x256xi1>, vector<48x256xf32>
    %25 = arith.mulf %7, %24 : vector<48x256xf32>
    %c0_8 = arith.constant 0 : index
    %c0_9 = arith.constant 0 : index
    %26 = vector.load %arg3[%c0_8, %c0_9] : memref<16x48xbf16, #tpu.memory_space<vmem>>, vector<16x48xbf16>
    %27 = arith.truncf %25 : vector<48x256xf32> to vector<48x256xbf16>
    %cst_10 = arith.constant dense<0.000000e+00> : vector<16x256xf32>
    %28 = tpu.matmul %26, %27, %cst_10 {dimension_numbers = #tpu.dot_dimension_numbers<[1], [0], [0], [1], [0, 0, 1, 1], [], []>} : vector<16x48xbf16>, vector<48x256xbf16>, vector<16x256xf32> -> vector<16x256xf32>
    %c0_11 = arith.constant 0 : index
    %c0_12 = arith.constant 0 : index
    %29 = vector.load %arg4[%c0_11, %c0_12] : memref<16x1xf32, #tpu.memory_space<vmem>>, vector<16x1xf32>
    %30 = vector.broadcast %29 : vector<16x1xf32> to vector<16x256xf32>
    %31 = arith.addf %28, %30 : vector<16x256xf32>
    %cst_13 = arith.constant dense<0.000000e+00> : vector<16xf32>
    %32 = vector.multi_reduction <add>, %31, %cst_13 [1] : vector<16x256xf32> to vector<16xf32>
    %33 = vector.shape_cast %32 : vector<16xf32> to vector<16x1xf32>
    %cst_14 = arith.constant 2.560000e+02 : f32
    %34 = vector.broadcast %cst_14 : f32 to vector<16x1xf32>
    %35 = arith.divf %33, %34 : vector<16x1xf32>
    %36 = vector.broadcast %35 : vector<16x1xf32> to vector<16x256xf32>
    %37 = arith.subf %31, %36 : vector<16x256xf32>
    %38 = arith.mulf %37, %37 : vector<16x256xf32>
    %cst_15 = arith.constant dense<0.000000e+00> : vector<16xf32>
    %39 = vector.multi_reduction <add>, %38, %cst_15 [1] : vector<16x256xf32> to vector<16xf32>
    %40 = vector.shape_cast %39 : vector<16xf32> to vector<16x1xf32>
    %cst_16 = arith.constant 2.560000e+02 : f32
    %41 = vector.broadcast %cst_16 : f32 to vector<16x1xf32>
    %42 = arith.divf %40, %41 : vector<16x1xf32>
    %cst_17 = arith.constant 9.99999974E-6 : f32
    %43 = vector.broadcast %cst_17 : f32 to vector<16x1xf32>
    %44 = arith.addf %42, %43 : vector<16x1xf32>
    %45 = math.rsqrt %44 : vector<16x1xf32>
    %cst_18 = arith.constant 0.000000e+00 : f32
    %46 = vector.broadcast %cst_18 : f32 to vector<16x256xf32>
    %47 = arith.cmpf ogt, %37, %46 : vector<16x256xf32>
    %cst_19 = arith.constant 2.000000e-01 : f32
    %48 = vector.broadcast %cst_19 : f32 to vector<16x1xf32>
    %49 = arith.mulf %48, %45 : vector<16x1xf32>
    %50 = vector.shape_cast %45 : vector<16x1xf32> to vector<16x1xf32>
    %51 = vector.broadcast %50 : vector<16x1xf32> to vector<16x256xf32>
    %52 = vector.shape_cast %49 : vector<16x1xf32> to vector<16x1xf32>
    %53 = vector.broadcast %52 : vector<16x1xf32> to vector<16x256xf32>
    %54 = arith.select %47, %51, %53 : vector<16x256xi1>, vector<16x256xf32>
    %55 = arith.mulf %37, %54 : vector<16x256xf32>
    %c36_i32 = arith.constant 36 : i32
    %56 = tpu.dynamic_rotate %55 by %c36_i32 dim 1 : vector<16x256xf32>, i32 -> vector<16x256xf32>
    %c0_20 = arith.constant 0 : index
    %c0_21 = arith.constant 0 : index
    %57 = vector.load %arg2[%c0_20, %c0_21] : memref<9x256xf32, #tpu.memory_space<vmem>>, vector<1x256xf32>
    %58 = vector.broadcast %57 : vector<1x256xf32> to vector<16x256xf32>
    %59 = arith.mulf %56, %58 : vector<16x256xf32>
    %60 = arith.truncf %59 : vector<16x256xf32> to vector<16x256xbf16>
    %c32_i32 = arith.constant 32 : i32
    %61 = tpu.dynamic_rotate %55 by %c32_i32 dim 1 : vector<16x256xf32>, i32 -> vector<16x256xf32>
    %c1 = arith.constant 1 : index
    %c0_22 = arith.constant 0 : index
    %62 = vector.load %arg2[%c1, %c0_22] : memref<9x256xf32, #tpu.memory_space<vmem>>, vector<1x256xf32>
    %63 = vector.broadcast %62 : vector<1x256xf32> to vector<16x256xf32>
    %64 = arith.mulf %61, %63 : vector<16x256xf32>
    %65 = arith.truncf %64 : vector<16x256xf32> to vector<16x256xbf16>
    %c28_i32 = arith.constant 28 : i32
    %66 = tpu.dynamic_rotate %55 by %c28_i32 dim 1 : vector<16x256xf32>, i32 -> vector<16x256xf32>
    %c2 = arith.constant 2 : index
    %c0_23 = arith.constant 0 : index
    %67 = vector.load %arg2[%c2, %c0_23] : memref<9x256xf32, #tpu.memory_space<vmem>>, vector<1x256xf32>
    %68 = vector.broadcast %67 : vector<1x256xf32> to vector<16x256xf32>
    %69 = arith.mulf %66, %68 : vector<16x256xf32>
    %70 = arith.truncf %69 : vector<16x256xf32> to vector<16x256xbf16>
    %c4_i32 = arith.constant 4 : i32
    %71 = tpu.dynamic_rotate %55 by %c4_i32 dim 1 : vector<16x256xf32>, i32 -> vector<16x256xf32>
    %c3 = arith.constant 3 : index
    %c0_24 = arith.constant 0 : index
    %72 = vector.load %arg2[%c3, %c0_24] : memref<9x256xf32, #tpu.memory_space<vmem>>, vector<1x256xf32>
    %73 = vector.broadcast %72 : vector<1x256xf32> to vector<16x256xf32>
    %74 = arith.mulf %71, %73 : vector<16x256xf32>
    %75 = arith.truncf %74 : vector<16x256xf32> to vector<16x256xbf16>
    %76 = arith.truncf %55 : vector<16x256xf32> to vector<16x256xbf16>
    %c252_i32 = arith.constant 252 : i32
    %77 = tpu.dynamic_rotate %55 by %c252_i32 dim 1 : vector<16x256xf32>, i32 -> vector<16x256xf32>
    %c5 = arith.constant 5 : index
    %c0_25 = arith.constant 0 : index
    %78 = vector.load %arg2[%c5, %c0_25] : memref<9x256xf32, #tpu.memory_space<vmem>>, vector<1x256xf32>
    %79 = vector.broadcast %78 : vector<1x256xf32> to vector<16x256xf32>
    %80 = arith.mulf %77, %79 : vector<16x256xf32>
    %81 = arith.truncf %80 : vector<16x256xf32> to vector<16x256xbf16>
    %c228_i32 = arith.constant 228 : i32
    %82 = tpu.dynamic_rotate %55 by %c228_i32 dim 1 : vector<16x256xf32>, i32 -> vector<16x256xf32>
    %c6 = arith.constant 6 : index
    %c0_26 = arith.constant 0 : index
    %83 = vector.load %arg2[%c6, %c0_26] : memref<9x256xf32, #tpu.memory_space<vmem>>, vector<1x256xf32>
    %84 = vector.broadcast %83 : vector<1x256xf32> to vector<16x256xf32>
    %85 = arith.mulf %82, %84 : vector<16x256xf32>
    %86 = arith.truncf %85 : vector<16x256xf32> to vector<16x256xbf16>
    %c224_i32 = arith.constant 224 : i32
    %87 = tpu.dynamic_rotate %55 by %c224_i32 dim 1 : vector<16x256xf32>, i32 -> vector<16x256xf32>
    %c7 = arith.constant 7 : index
    %c0_27 = arith.constant 0 : index
    %88 = vector.load %arg2[%c7, %c0_27] : memref<9x256xf32, #tpu.memory_space<vmem>>, vector<1x256xf32>
    %89 = vector.broadcast %88 : vector<1x256xf32> to vector<16x256xf32>
    %90 = arith.mulf %87, %89 : vector<16x256xf32>
    %91 = arith.truncf %90 : vector<16x256xf32> to vector<16x256xbf16>
    %c220_i32 = arith.constant 220 : i32
    %92 = tpu.dynamic_rotate %55 by %c220_i32 dim 1 : vector<16x256xf32>, i32 -> vector<16x256xf32>
    %c8 = arith.constant 8 : index
    %c0_28 = arith.constant 0 : index
    %93 = vector.load %arg2[%c8, %c0_28] : memref<9x256xf32, #tpu.memory_space<vmem>>, vector<1x256xf32>
    %94 = vector.broadcast %93 : vector<1x256xf32> to vector<16x256xf32>
    %95 = arith.mulf %92, %94 : vector<16x256xf32>
    %96 = arith.truncf %95 : vector<16x256xf32> to vector<16x256xbf16>
    %97 = tpu.concatenate %60, %65, %70, %75, %76, %81, %86, %91, %96 in 0 : vector<16x256xbf16>, vector<16x256xbf16>, vector<16x256xbf16>, vector<16x256xbf16>, vector<16x256xbf16>, vector<16x256xbf16>, vector<16x256xbf16>, vector<16x256xbf16>, vector<16x256xbf16> -> vector<144x256xbf16>
    %c0_29 = arith.constant 0 : index
    %c0_30 = arith.constant 0 : index
    %98 = vector.load %arg5[%c0_29, %c0_30] : memref<16x144xbf16, #tpu.memory_space<vmem>>, vector<16x144xbf16>
    %cst_31 = arith.constant dense<0.000000e+00> : vector<16x256xf32>
    %99 = tpu.matmul %98, %97, %cst_31 {dimension_numbers = #tpu.dot_dimension_numbers<[1], [0], [0], [1], [0, 0, 1, 1], [], []>} : vector<16x144xbf16>, vector<144x256xbf16>, vector<16x256xf32> -> vector<16x256xf32>
    %c0_32 = arith.constant 0 : index
    %c0_33 = arith.constant 0 : index
    %100 = vector.load %arg6[%c0_32, %c0_33] : memref<16x1xf32, #tpu.memory_space<vmem>>, vector<16x1xf32>
    %101 = vector.broadcast %100 : vector<16x1xf32> to vector<16x256xf32>
    %102 = arith.addf %99, %101 : vector<16x256xf32>
    %cst_34 = arith.constant dense<0.000000e+00> : vector<16xf32>
    %103 = vector.multi_reduction <add>, %102, %cst_34 [1] : vector<16x256xf32> to vector<16xf32>
    %104 = vector.shape_cast %103 : vector<16xf32> to vector<16x1xf32>
    %cst_35 = arith.constant 2.560000e+02 : f32
    %105 = vector.broadcast %cst_35 : f32 to vector<16x1xf32>
    %106 = arith.divf %104, %105 : vector<16x1xf32>
    %107 = vector.broadcast %106 : vector<16x1xf32> to vector<16x256xf32>
    %108 = arith.subf %102, %107 : vector<16x256xf32>
    %109 = arith.mulf %108, %108 : vector<16x256xf32>
    %cst_36 = arith.constant dense<0.000000e+00> : vector<16xf32>
    %110 = vector.multi_reduction <add>, %109, %cst_36 [1] : vector<16x256xf32> to vector<16xf32>
    %111 = vector.shape_cast %110 : vector<16xf32> to vector<16x1xf32>
    %cst_37 = arith.constant 2.560000e+02 : f32
    %112 = vector.broadcast %cst_37 : f32 to vector<16x1xf32>
    %113 = arith.divf %111, %112 : vector<16x1xf32>
    %cst_38 = arith.constant 9.99999974E-6 : f32
    %114 = vector.broadcast %cst_38 : f32 to vector<16x1xf32>
    %115 = arith.addf %113, %114 : vector<16x1xf32>
    %116 = math.rsqrt %115 : vector<16x1xf32>
    %cst_39 = arith.constant 0.000000e+00 : f32
    %117 = vector.broadcast %cst_39 : f32 to vector<16x256xf32>
    %118 = arith.cmpf ogt, %108, %117 : vector<16x256xf32>
    %cst_40 = arith.constant 2.000000e-01 : f32
    %119 = vector.broadcast %cst_40 : f32 to vector<16x1xf32>
    %120 = arith.mulf %119, %116 : vector<16x1xf32>
    %121 = vector.shape_cast %116 : vector<16x1xf32> to vector<16x1xf32>
    %122 = vector.broadcast %121 : vector<16x1xf32> to vector<16x256xf32>
    %123 = vector.shape_cast %120 : vector<16x1xf32> to vector<16x1xf32>
    %124 = vector.broadcast %123 : vector<16x1xf32> to vector<16x256xf32>
    %125 = arith.select %118, %122, %124 : vector<16x256xi1>, vector<16x256xf32>
    %126 = arith.mulf %108, %125 : vector<16x256xf32>
    %c0_41 = arith.constant 0 : index
    %c0_42 = arith.constant 0 : index
    %127 = vector.load %arg7[%c0_41, %c0_42] : memref<16x16xbf16, #tpu.memory_space<vmem>>, vector<16x16xbf16>
    %128 = arith.truncf %126 : vector<16x256xf32> to vector<16x256xbf16>
    %cst_43 = arith.constant dense<0.000000e+00> : vector<16x256xf32>
    %129 = tpu.matmul %127, %128, %cst_43 {dimension_numbers = #tpu.dot_dimension_numbers<[1], [0], [0], [1], [0, 0, 1, 1], [], []>} : vector<16x16xbf16>, vector<16x256xbf16>, vector<16x256xf32> -> vector<16x256xf32>
    %c0_44 = arith.constant 0 : index
    %c0_45 = arith.constant 0 : index
    %130 = vector.load %arg8[%c0_44, %c0_45] : memref<16x1xf32, #tpu.memory_space<vmem>>, vector<16x1xf32>
    %131 = vector.broadcast %130 : vector<16x1xf32> to vector<16x256xf32>
    %132 = arith.addf %129, %131 : vector<16x256xf32>
    %c0_46 = arith.constant 0 : index
    %c0_47 = arith.constant 0 : index
    %c0_48 = arith.constant 0 : index
    %133 = vector.load %arg9[%c0_46, %c0_47, %c0_48] : memref<1x16x256xf32, #tpu.memory_space<vmem>>, vector<1x16x256xf32>
    %134 = vector.shape_cast %133 : vector<1x16x256xf32> to vector<16x256xf32>
    %135 = vector.shape_cast %132 : vector<16x256xf32> to vector<1x16x256xf32>
    tpu.vector_store %arg9[%c0_46, %c0_47, %c0_48], %135 {strides = array<i32>} : memref<1x16x256xf32, #tpu.memory_space<vmem>>, vector<1x16x256xf32>,
    return
  }
  func.func @transform_0(%arg0: i32) -> (i32, i32, i32) {
    %c0_i32 = arith.constant 0 : i32
    %c0_i32_0 = arith.constant 0 : i32
    %c0_i32_1 = arith.constant 0 : i32
    return %arg0, %c0_i32, %c0_i32_0 : i32, i32, i32
  }
  func.func @transform_1(%arg0: i32) -> (i32, i32) {
    %c0_i32 = arith.constant 0 : i32
    %c0_i32_0 = arith.constant 0 : i32
    %c0_i32_1 = arith.constant 0 : i32
    return %c0_i32, %c0_i32_0 : i32, i32
  }
  func.func @transform_2(%arg0: i32) -> (i32, i32) {
    %c0_i32 = arith.constant 0 : i32
    %c0_i32_0 = arith.constant 0 : i32
    %c0_i32_1 = arith.constant 0 : i32
    return %c0_i32, %c0_i32_0 : i32, i32
  }
  func.func @transform_3(%arg0: i32) -> (i32, i32) {
    %c0_i32 = arith.constant 0 : i32
    %c0_i32_0 = arith.constant 0 : i32
    %c0_i32_1 = arith.constant 0 : i32
    return %c0_i32, %c0_i32_0 : i32, i32
  }
  func.func @transform_4(%arg0: i32) -> (i32, i32) {
    %c0_i32 = arith.constant 0 : i32
    %c0_i32_0 = arith.constant 0 : i32
    %c0_i32_1 = arith.constant 0 : i32
    return %c0_i32, %c0_i32_0 : i32, i32
  }
  func.func @transform_5(%arg0: i32) -> (i32, i32) {
    %c0_i32 = arith.constant 0 : i32
    %c0_i32_0 = arith.constant 0 : i32
    %c0_i32_1 = arith.constant 0 : i32
    return %c0_i32, %c0_i32_0 : i32, i32
  }
  func.func @transform_6(%arg0: i32) -> (i32, i32) {
    %c0_i32 = arith.constant 0 : i32
    %c0_i32_0 = arith.constant 0 : i32
    %c0_i32_1 = arith.constant 0 : i32
    return %c0_i32, %c0_i32_0 : i32, i32
  }
  func.func @transform_7(%arg0: i32) -> (i32, i32) {
    %c0_i32 = arith.constant 0 : i32
    %c0_i32_0 = arith.constant 0 : i32
    %c0_i32_1 = arith.constant 0 : i32
    return %c0_i32, %c0_i32_0 : i32, i32
  }
  func.func @transform_8(%arg0: i32) -> (i32, i32, i32) {
    %c0_i32 = arith.constant 0 : i32
    %c0_i32_0 = arith.constant 0 : i32
    %c0_i32_1 = arith.constant 0 : i32
    return %arg0, %c0_i32, %c0_i32_0 : i32, i32, i32
  }
}

</mosaic_0001>

<llo_original>
// kernel: tpu_custom_call.1
$region0: #{tpu_custom_call.1}
  #allocation0 [shape = 'u32[]', space=smem, size = 0x4, offset = 0x4, fixed_abs, tag = 'smem constant byte address 0x4 - core index']
  #allocation1 [shape = 'u32[144,128]{1,0:T(1,128)}', space=vmem, size = 0x12000, scoped, tag = 'internal scratch']
  %s0 = inlined_call_operand.hbm [shape: f32[2,48,256], index: 0, kind: input, shape index: {}]
  %s1 = inlined_call_operand.vmem [shape: f32[9,256], index: 1, kind: input, shape index: {}]
  %s2 = inlined_call_operand.vmem [shape: bf16[16,48], index: 2, kind: input, shape index: {}]
  %s3 = inlined_call_operand.vmem [shape: f32[16,1], index: 3, kind: input, shape index: {}]
  %s4 = inlined_call_operand.vmem [shape: bf16[16,144], index: 4, kind: input, shape index: {}]
  %s5 = inlined_call_operand.vmem [shape: f32[16,1], index: 5, kind: input, shape index: {}]
  %s6 = inlined_call_operand.vmem [shape: bf16[16,16], index: 6, kind: input, shape index: {}]
  %s7 = inlined_call_operand.vmem [shape: f32[16,1], index: 7, kind: input, shape index: {}]
  %s8 = inlined_call_operand.hbm [shape: f32[2,16,256], index: 8, kind: output, shape index: {}]
  %s9 = sld [smem:[#allocation0]]
  $region69: #{tpu_custom_call.1} parent=0
    _
  %s11 = ssub.s32 1, %s9
  %s12 = scalar_select 0, %s11, %s9
  $region1: #{tpu_custom_call.1} parent=0
    #allocation2 [shape = 'u8[98304]{0}', space=vmem, size = 0x18000, scoped, tag = 'input window, operand 0']
    #allocation3 [shape = 's32[2]{0}', space=sflag, size = 0x8, scoped, tag = 'scoped memory for tpu_custom_call.1']
    #allocation4 [shape = 's32[2]{0}', space=sflag, size = 0x8, scoped, tag = 'scoped memory for tpu_custom_call.1']
    #allocation5 [shape = 'u8[32768]{0}', space=vmem, size = 0x8000, scoped, tag = 'output window, operand 0']
    %13 = vsyncpa [#allocation3], 0
    %s14 = scalar_lea.sflag [#allocation3], 1
    %15 = vsyncpa %s14, 0
    %16 = vsyncpa [#allocation4], 0
    %s17 = scalar_lea.sflag [#allocation4], 1
    %18 = vsyncpa %s17, 0
    loop: start=0, step=1, limit=4
    $region2: #{tpu_custom_call.1} parent=1 // loop_pre_header
      _
    $region3: #{tpu_custom_call.1} parent=1 // loop_header
      %s20 = sphi 0, %s24
      %p21 = scmp.ge.s32.totalorder %s20, 4
      %s30 = sphi 0, %s32
      %s33 = sphi 0, %s30
      %s34 = sphi 0, %s33
      %s50 = sphi 0, %s34
      %s54 = sphi 0, %s54
      %s56 = sphi 0, %s54
      %s57 = sphi 0, %s56
      %s71 = sphi 0, %s57
      %s75 = sphi 0, %s75
      %s77 = sphi 0, %s75
      %s78 = sphi 0, %s77
      %s92 = sphi 0, %s78
      %s96 = sphi 0, %s96
      %s98 = sphi 0, %s96
      %s99 = sphi 0, %s98
      %s113 = sphi 0, %s99
      %s117 = sphi 0, %s117
      %s119 = sphi 0, %s117
      %s120 = sphi 0, %s119
      %s134 = sphi 0, %s120
      %s138 = sphi 0, %s138
      %s140 = sphi 0, %s138
      %s141 = sphi 0, %s140
      %s155 = sphi 0, %s141
      %s159 = sphi 0, %s159
      %s161 = sphi 0, %s159
      %s162 = sphi 0, %s161
      %s176 = sphi 0, %s162
      %s180 = sphi 0, %s180
      %s182 = sphi 0, %s180
      %s183 = sphi 0, %s182
      %s197 = sphi 0, %s183
      %s203 = sphi 0, %s205
      %s206 = sphi 0, %s203
      %s207 = sphi 0, %s206
      %s223 = sphi 0, %s207
    $region4: #{tpu_custom_call.1} parent=1 // loop_header_branch
      %23 = sbr.rel (%p21) target = $region8
    $region5: #{tpu_custom_call.1} parent=1 // loop_body
      %s25 = ssub.s32 %s20, 1
      %s26 = ssub.s32 %s20, 2
      %s27 = sadd.s32 %s20, 1
      %s28 = ssub.s32 %s20, %s27
      %p29 = scmp.eq.s32.totalorder %s28, 0
      %s31 = sadd.s32 %s30, 1
      %s32 = scalar_select %p29, %s30, %s31
      %p35 = pneg %p29
      %p36 = scmp.eq.s32.totalorder %s20, 1
      %p37 = por %p35, %p36
      %p38 = scmp.ne.s32.totalorder %s30, %s33
      %p39 = scmp.eq.s32.totalorder %s20, 0
      %p40 = por %p38, %p39
      %p41 = scmp.ne.s32.totalorder %s30, %s33
      %p42 = scmp.eq.s32.totalorder %s25, 1
      %p43 = por %p41, %p42
      %p44 = scmp.ne.s32.totalorder %s33, %s34
      %p45 = scmp.eq.s32.totalorder %s25, 0
      %p46 = por %p44, %p45
      %p47 = scmp.ne.s32.totalorder %s33, %s34
      %p48 = scmp.eq.s32.totalorder %s26, 1
      %p49 = por %p47, %p48
      %p51 = scmp.ne.s32.totalorder %s34, %s50
      %p52 = scmp.eq.s32.totalorder %s26, 0
      %p53 = por %p51, %p52
      %s55 = sadd.s32 %s54, 1
      %p58 = scmp.eq.s32.totalorder %s20, 1
      %p59 = scmp.ne.s32.totalorder %s54, %s56
      %p60 = scmp.eq.s32.totalorder %s20, 0
      %p61 = por %p59, %p60
      %p62 = scmp.ne.s32.totalorder %s54, %s56
      %p63 = scmp.eq.s32.totalorder %s25, 1
      %p64 = por %p62, %p63
      %p65 = scmp.ne.s32.totalorder %s56, %s57
      %p66 = scmp.eq.s32.totalorder %s25, 0
      %p67 = por %p65, %p66
      %p68 = scmp.ne.s32.totalorder %s56, %s57
      %p69 = scmp.eq.s32.totalorder %s26, 1
      %p70 = por %p68, %p69
      %p72 = scmp.ne.s32.totalorder %s57, %s71
      %p73 = scmp.eq.s32.totalorder %s26, 0
      %p74 = por %p72, %p73
      %s76 = sadd.s32 %s75, 1
      %p79 = scmp.eq.s32.totalorder %s20, 1
      %p80 = scmp.ne.s32.totalorder %s75, %s77
      %p81 = scmp.eq.s32.totalorder %s20, 0
      %p82 = por %p80, %p81
      %p83 = scmp.ne.s32.totalorder %s75, %s77
      %p84 = scmp.eq.s32.totalorder %s25, 1
      %p85 = por %p83, %p84
      %p86 = scmp.ne.s32.totalorder %s77, %s78
      %p87 = scmp.eq.s32.totalorder %s25, 0
      %p88 = por %p86, %p87
      %p89 = scmp.ne.s32.totalorder %s77, %s78
      %p90 = scmp.eq.s32.totalorder %s26, 1
      %p91 = por %p89, %p90
      %p93 = scmp.ne.s32.totalorder %s78, %s92
      %p94 = scmp.eq.s32.totalorder %s26, 0
      %p95 = por %p93, %p94
      %s97 = sadd.s32 %s96, 1
      %p100 = scmp.eq.s32.totalorder %s20, 1
      %p101 = scmp.ne.s32.totalorder %s96, %s98
      %p102 = scmp.eq.s32.totalorder %s20, 0
      %p103 = por %p101, %p102
      %p104 = scmp.ne.s32.totalorder %s96, %s98
      %p105 = scmp.eq.s32.totalorder %s25, 1
      %p106 = por %p104, %p105
      %p107 = scmp.ne.s32.totalorder %s98, %s99
      %p108 = scmp.eq.s32.totalorder %s25, 0
      %p109 = por %p107, %p108
      %p110 = scmp.ne.s32.totalorder %s98, %s99
      %p111 = scmp.eq.s32.totalorder %s26, 1
      %p112 = por %p110, %p111
      %p114 = scmp.ne.s32.totalorder %s99, %s113
      %p115 = scmp.eq.s32.totalorder %s26, 0
      %p116 = por %p114, %p115
      %s118 = sadd.s32 %s117, 1
      %p121 = scmp.eq.s32.totalorder %s20, 1
      %p122 = scmp.ne.s32.totalorder %s117, %s119
      %p123 = scmp.eq.s32.totalorder %s20, 0
      %p124 = por %p122, %p123
      %p125 = scmp.ne.s32.totalorder %s117, %s119
      %p126 = scmp.eq.s32.totalorder %s25, 1
      %p127 = por %p125, %p126
      %p128 = scmp.ne.s32.totalorder %s119, %s120
      %p129 = scmp.eq.s32.totalorder %s25, 0
      %p130 = por %p128, %p129
      %p131 = scmp.ne.s32.totalorder %s119, %s120
      %p132 = scmp.eq.s32.totalorder %s26, 1
      %p133 = por %p131, %p132
      %p135 = scmp.ne.s32.totalorder %s120, %s134
      %p136 = scmp.eq.s32.totalorder %s26, 0
      %p137 = por %p135, %p136
      %s139 = sadd.s32 %s138, 1
      %p142 = scmp.eq.s32.totalorder %s20, 1
      %p143 = scmp.ne.s32.totalorder %s138, %s140
      %p144 = scmp.eq.s32.totalorder %s20, 0
      %p145 = por %p143, %p144
      %p146 = scmp.ne.s32.totalorder %s138, %s140
      %p147 = scmp.eq.s32.totalorder %s25, 1
      %p148 = por %p146, %p147
      %p149 = scmp.ne.s32.totalorder %s140, %s141
      %p150 = scmp.eq.s32.totalorder %s25, 0
      %p151 = por %p149, %p150
      %p152 = scmp.ne.s32.totalorder %s140, %s141
      %p153 = scmp.eq.s32.totalorder %s26, 1
      %p154 = por %p152, %p153
      %p156 = scmp.ne.s32.totalorder %s141, %s155
      %p157 = scmp.eq.s32.totalorder %s26, 0
      %p158 = por %p156, %p157
      %s160 = sadd.s32 %s159, 1
      %p163 = scmp.eq.s32.totalorder %s20, 1
      %p164 = scmp.ne.s32.totalorder %s159, %s161
      %p165 = scmp.eq.s32.totalorder %s20, 0
      %p166 = por %p164, %p165
      %p167 = scmp.ne.s32.totalorder %s159, %s161
      %p168 = scmp.eq.s32.totalorder %s25, 1
      %p169 = por %p167, %p168
      %p170 = scmp.ne.s32.totalorder %s161, %s162
      %p171 = scmp.eq.s32.totalorder %s25, 0
      %p172 = por %p170, %p171
      %p173 = scmp.ne.s32.totalorder %s161, %s162
      %p174 = scmp.eq.s32.totalorder %s26, 1
      %p175 = por %p173, %p174
      %p177 = scmp.ne.s32.totalorder %s162, %s176
      %p178 = scmp.eq.s32.totalorder %s26, 0
      %p179 = por %p177, %p178
      %s181 = sadd.s32 %s180, 1
      %p184 = scmp.eq.s32.totalorder %s20, 1
      %p185 = scmp.ne.s32.totalorder %s180, %s182
      %p186 = scmp.eq.s32.totalorder %s20, 0
      %p187 = por %p185, %p186
      %p188 = scmp.ne.s32.totalorder %s180, %s182
      %p189 = scmp.eq.s32.totalorder %s25, 1
      %p190 = por %p188, %p189
      %p191 = scmp.ne.s32.totalorder %s182, %s183
      %p192 = scmp.eq.s32.totalorder %s25, 0
      %p193 = por %p191, %p192
      %p194 = scmp.ne.s32.totalorder %s182, %s183
      %p195 = scmp.eq.s32.totalorder %s26, 1
      %p196 = por %p194, %p195
      %p198 = scmp.ne.s32.totalorder %s183, %s197
      %p199 = scmp.eq.s32.totalorder %s26, 0
      %p200 = por %p198, %p199
      %s201 = ssub.s32 %s20, %s27
      %p202 = scmp.eq.s32.totalorder %s201, 0
      %s204 = sadd.s32 %s203, 1
      %s205 = scalar_select %p202, %s203, %s204
      %p208 = pneg %p202
      %p209 = scmp.eq.s32.totalorder %s20, 1
      %p210 = por %p208, %p209
      %p211 = scmp.ne.s32.totalorder %s203, %s206
      %p212 = scmp.eq.s32.totalorder %s20, 0
      %p213 = por %p211, %p212
      %p214 = scmp.ne.s32.totalorder %s203, %s206
      %p215 = scmp.eq.s32.totalorder %s25, 1
      %p216 = por %p214, %p215
      %p217 = scmp.ne.s32.totalorder %s206, %s207
      %p218 = scmp.eq.s32.totalorder %s25, 0
      %p219 = por %p217, %p218
      %p220 = scmp.ne.s32.totalorder %s206, %s207
      %p221 = scmp.eq.s32.totalorder %s26, 1
      %p222 = por %p220, %p221
      %p224 = scmp.ne.s32.totalorder %s207, %s223
      %p225 = scmp.eq.s32.totalorder %s26, 0
      %p226 = por %p224, %p225
      %p227 = scmp.le.s32.totalorder 1, %s20
      %p228 = scmp.lt.s32.totalorder %s20, 3
      %p229 = pnand %p227, %p228
      %p230 = pneg %p229
      // Predicated region
      $region9: #{tpu_custom_call.1} parent=5 // pred_check
        _
      $region10: #{tpu_custom_call.1} parent=5 // pred_check_branch
        %232 = sbr.rel (%p229) target = $region12
      $region11: #{tpu_custom_call.1} parent=5 // pred_region
        %s233 = ssub.s32 %s20, 1
        // Predicated region
        $region13: #{tpu_custom_call.1} parent=11 // pred_check
          %p234 = pneg %p67
        $region14: #{tpu_custom_call.1} parent=11 // pred_check_branch
          %236 = sbr.rel (%p234) target = $region16
        $region15: #{tpu_custom_call.1} parent=11 // pred_region
          _
        $region16: #{tpu_custom_call.1} parent=11 // pred_fallthru
          _
        // Predicated region
        $region17: #{tpu_custom_call.1} parent=11 // pred_check
          %p237 = pneg %p88
        $region18: #{tpu_custom_call.1} parent=11 // pred_check_branch
          %239 = sbr.rel (%p237) target = $region20
        $region19: #{tpu_custom_call.1} parent=11 // pred_region
          _
        $region20: #{tpu_custom_call.1} parent=11 // pred_fallthru
          _
        // Predicated region
        $region21: #{tpu_custom_call.1} parent=11 // pred_check
          %p240 = pneg %p109
        $region22: #{tpu_custom_call.1} parent=11 // pred_check_branch
          %242 = sbr.rel (%p240) target = $region24
        $region23: #{tpu_custom_call.1} parent=11 // pred_region
          _
        $region24: #{tpu_custom_call.1} parent=11 // pred_fallthru
          _
        // Predicated region
        $region25: #{tpu_custom_call.1} parent=11 // pred_check
          %p243 = pneg %p130
        $region26: #{tpu_custom_call.1} parent=11 // pred_check_branch
          %245 = sbr.rel (%p243) target = $region28
        $region27: #{tpu_custom_call.1} parent=11 // pred_region
          _
        $region28: #{tpu_custom_call.1} parent=11 // pred_fallthru
          _
        // Predicated region
        $region29: #{tpu_custom_call.1} parent=11 // pred_check
          %p246 = pneg %p151
        $region30: #{tpu_custom_call.1} parent=11 // pred_check_branch
          %248 = sbr.rel (%p246) target = $region32
        $region31: #{tpu_custom_call.1} parent=11 // pred_region
          _
        $region32: #{tpu_custom_call.1} parent=11 // pred_fallthru
          _
        // Predicated region
        $region33: #{tpu_custom_call.1} parent=11 // pred_check
          %p249 = pneg %p172
        $region34: #{tpu_custom_call.1} parent=11 // pred_check_branch
          %251 = sbr.rel (%p249) target = $region36
        $region35: #{tpu_custom_call.1} parent=11 // pred_region
          _
        $region36: #{tpu_custom_call.1} parent=11 // pred_fallthru
          _
        // Predicated region
        $region37: #{tpu_custom_call.1} parent=11 // pred_check
          %p252 = pneg %p193
        $region38: #{tpu_custom_call.1} parent=11 // pred_check_branch
          %254 = sbr.rel (%p252) target = $region40
        $region39: #{tpu_custom_call.1} parent=11 // pred_region
          _
        $region40: #{tpu_custom_call.1} parent=11 // pred_fallthru
          _
      $region12: #{tpu_custom_call.1} parent=5 // pred_fallthru
        _
      %p255 = scmp.lt.s32.totalorder %s20, 2
      // Predicated region
      $region41: #{tpu_custom_call.1} parent=5 // pred_check
        %p256 = pneg %p255
      $region42: #{tpu_custom_call.1} parent=5 // pred_check_branch
        %258 = sbr.rel (%p256) target = $region44
      $region43: #{tpu_custom_call.1} parent=5 // pred_region
        // Predicated region
        $region45: #{tpu_custom_call.1} parent=43 // pred_check
          %p259 = pneg %p40
        $region46: #{tpu_custom_call.1} parent=43 // pred_check_branch
          %261 = sbr.rel (%p259) target = $region48
        $region47: #{tpu_custom_call.1} parent=43 // pred_region
          %s262 = sand.u32 %s30, 1
          %s263 = scalar_lea.sflag [#allocation3], %s262
          %s264 = sand.u32 %s30, 1
          %s265 = smul.addr %s264, 96
          %s266 = scalar_lea.vmem [#allocation2], %s265
          %s268 = ssub.s32 1536, 1536
          %269 = vsyncadd %s263, %s268
          %s270 = smul.addr %s20, 12
          %s271 = smul.addr %s270, 128
          %s272 = scalar_lea.hbm %s0, %s271
          %s273 = sshll.u32 %s266, 4
          %s274 = int_to_ptr.vmem [resolvable:$true] %s273
          %279 = dma.hbm_to_vmem [thread:$0]  %s272, 1536, %s274, %s263, 256, 256, 16
        $region48: #{tpu_custom_call.1} parent=43 // pred_fallthru
          _
      $region44: #{tpu_custom_call.1} parent=5 // pred_fallthru
        _
      %p280 = scmp.le.s32.totalorder 1, %s20
      %p281 = scmp.lt.s32.totalorder %s20, 3
      %p282 = pnand %p280, %p281
      %p283 = pneg %p282
      // Predicated region
      $region49: #{tpu_custom_call.1} parent=5 // pred_check
        _
      $region50: #{tpu_custom_call.1} parent=5 // pred_check_branch
        %285 = sbr.rel (%p282) target = $region52
      $region51: #{tpu_custom_call.1} parent=5 // pred_region
        %s286 = ssub.s32 %s20, 1
        %s287 = sand.u32 %s33, 1
        %s288 = scalar_lea.sflag [#allocation3], %s287
        %s289 = sand.u32 %s33, 1
        %s290 = smul.addr %s289, 96
        %s291 = scalar_lea.vmem [#allocation2], %s290
        // Predicated region
        $region53: #{tpu_custom_call.1} parent=51 // pred_check
          %p292 = pneg %p46
        $region54: #{tpu_custom_call.1} parent=51 // pred_check_branch
          %294 = sbr.rel (%p292) target = $region56
        $region55: #{tpu_custom_call.1} parent=51 // pred_region
          %295 = dma.done %s288, 1536
        $region56: #{tpu_custom_call.1} parent=51 // pred_fallthru
          _
        %s296 = sand.u32 %s33, 1
        %s297 = scalar_lea.sflag [#allocation3], %s296
        %s298 = sand.u32 %s33, 1
        %s299 = smul.addr %s298, 96
        %s300 = scalar_lea.vmem [#allocation2], %s299
        %p301 = pneg %p46
        %p302 = pneg %p43
        %p303 = pneg %p67
        %p304 = pneg %p64
        %p305 = pneg %p88
        %p306 = pneg %p85
        %p307 = pneg %p109
        %p308 = pneg %p106
        %p309 = pneg %p130
        %p310 = pneg %p127
        %p311 = pneg %p151
        %p312 = pneg %p148
        %p313 = pneg %p172
        %p314 = pneg %p169
        %p315 = pneg %p193
        %p316 = pneg %p190
        %p317 = pneg %p219
        %p318 = pneg %p216
        %s319 = sand.u32 %s206, 1
        %s320 = scalar_lea.sflag [#allocation4], %s319
        %s321 = sand.u32 %s206, 1
        %s322 = smul.addr %s321, 32
        %s323 = scalar_lea.vmem [#allocation5], %s322
        %v325 = vld [vmem:[%s291] sm:$0xff]
        %v326 = vld [vmem:[%s291 + $0x8] sm:$0xff]
        %v327 = vld [vmem:[%s291 + $0x10] sm:$0xff]
        %v328 = vld [vmem:[%s291 + $0x18] sm:$0xff]
        %v329 = vld [vmem:[%s291 + $0x20] sm:$0xff]
        %v330 = vld [vmem:[%s291 + $0x28] sm:$0xff]
        %v331 = vld [vmem:[%s291 + $0x30] sm:$0xff]
        %v332 = vld [vmem:[%s291 + $0x38] sm:$0xff]
        %v333 = vld [vmem:[%s291 + $0x40] sm:$0xff]
        %v334 = vld [vmem:[%s291 + $0x48] sm:$0xff]
        %v335 = vld [vmem:[%s291 + $0x50] sm:$0xff]
        %v336 = vld [vmem:[%s291 + $0x58] sm:$0xff]
        %v337 = vadd.f32 %v325, %v326
        %338 = vadd.xlane.f32.xlu0 %v337
        %v339 = vpop.xlane.xlu0 %338
        %v340 = vadd.f32 %v327, %v328
        %341 = vadd.xlane.f32.xlu0 %v340
        %v342 = vpop.xlane.xlu0 %341
        %v343 = vadd.f32 %v329, %v330
        %344 = vadd.xlane.f32.xlu0 %v343
        %v345 = vpop.xlane.xlu0 %344
        %v346 = vadd.f32 %v331, %v332
        %347 = vadd.xlane.f32.xlu0 %v346
        %v348 = vpop.xlane.xlu0 %347
        %v349 = vadd.f32 %v333, %v334
        %350 = vadd.xlane.f32.xlu0 %v349
        %v351 = vpop.xlane.xlu0 %350
        %v352 = vadd.f32 %v335, %v336
        %353 = vadd.xlane.f32.xlu0 %v352
        %v354 = vpop.xlane.xlu0 %353
        %v355 = vrcp.pop 256.0
        %v356 = vmul.f32 %v339, %v355
        %v357 = vmul.f32 %v342, %v355
        %v358 = vmul.f32 %v345, %v355
        %v359 = vmul.f32 %v348, %v355
        %v360 = vmul.f32 %v351, %v355
        %v361 = vmul.f32 %v354, %v355
        %v362 = vsub.f32 %v325, %v356
        %v363 = vsub.f32 %v326, %v356
        %v364 = vsub.f32 %v327, %v357
        %v365 = vsub.f32 %v328, %v357
        %v366 = vsub.f32 %v329, %v358
        %v367 = vsub.f32 %v330, %v358
        %v368 = vsub.f32 %v331, %v359
        %v369 = vsub.f32 %v332, %v359
        %v370 = vsub.f32 %v333, %v360
        %v371 = vsub.f32 %v334, %v360
        %v372 = vsub.f32 %v335, %v361
        %v373 = vsub.f32 %v336, %v361
        %v374 = vmul.f32 %v362, %v362
        %v375 = vmul.f32 %v363, %v363
        %v376 = vmul.f32 %v364, %v364
        %v377 = vmul.f32 %v365, %v365
        %v378 = vmul.f32 %v366, %v366
        %v379 = vmul.f32 %v367, %v367
        %v380 = vmul.f32 %v368, %v368
        %v381 = vmul.f32 %v369, %v369
        %v382 = vmul.f32 %v370, %v370
        %v383 = vmul.f32 %v371, %v371
        %v384 = vmul.f32 %v372, %v372
        %v385 = vmul.f32 %v373, %v373
        %v386 = vadd.f32 %v374, %v375
        %387 = vadd.xlane.f32.xlu0 %v386
        %v388 = vpop.xlane.xlu0 %387
        %v389 = vadd.f32 %v376, %v377
        %390 = vadd.xlane.f32.xlu0 %v389
        %v391 = vpop.xlane.xlu0 %390
        %v392 = vadd.f32 %v378, %v379
        %393 = vadd.xlane.f32.xlu0 %v392
        %v394 = vpop.xlane.xlu0 %393
        %v395 = vadd.f32 %v380, %v381
        %396 = vadd.xlane.f32.xlu0 %v395
        %v397 = vpop.xlane.xlu0 %396
        %v398 = vadd.f32 %v382, %v383
        %399 = vadd.xlane.f32.xlu0 %v398
        %v400 = vpop.xlane.xlu0 %399
        %v401 = vadd.f32 %v384, %v385
        %402 = vadd.xlane.f32.xlu0 %v401
        %v403 = vpop.xlane.xlu0 %402
        %v404 = vmul.f32 %v388, %v355
        %v405 = vmul.f32 %v391, %v355
        %v406 = vmul.f32 %v394, %v355
        %v407 = vmul.f32 %v397, %v355
        %v408 = vmul.f32 %v400, %v355
        %v409 = vmul.f32 %v403, %v355
        %v410 = vadd.f32 %v404, 1e-05
        %v411 = vadd.f32 %v405, 1e-05
        %v412 = vadd.f32 %v406, 1e-05
        %v413 = vadd.f32 %v407, 1e-05
        %v414 = vadd.f32 %v408, 1e-05
        %v415 = vadd.f32 %v409, 1e-05
        %v416 = vrsqrt.pop %v410
        %v417 = vrsqrt.pop %v411
        %v418 = vrsqrt.pop %v412
        %v419 = vrsqrt.pop %v413
        %v420 = vrsqrt.pop %v414
        %v421 = vrsqrt.pop %v415
        %vm422 = vcmp.gt.f32.partialorder %v362, 0.0
        %vm423 = vcmp.gt.f32.partialorder %v363, 0.0
        %vm424 = vcmp.gt.f32.partialorder %v364, 0.0
        %vm425 = vcmp.gt.f32.partialorder %v365, 0.0
        %vm426 = vcmp.gt.f32.partialorder %v366, 0.0
        %vm427 = vcmp.gt.f32.partialorder %v367, 0.0
        %vm428 = vcmp.gt.f32.partialorder %v368, 0.0
        %vm429 = vcmp.gt.f32.partialorder %v369, 0.0
        %vm430 = vcmp.gt.f32.partialorder %v370, 0.0
        %vm431 = vcmp.gt.f32.partialorder %v371, 0.0
        %vm432 = vcmp.gt.f32.partialorder %v372, 0.0
        %vm433 = vcmp.gt.f32.partialorder %v373, 0.0
        %v434 = vmul.f32 %v416, 0.2
        %v435 = vmul.f32 %v417, 0.2
        %v436 = vmul.f32 %v418, 0.2
        %v437 = vmul.f32 %v419, 0.2
        %v438 = vmul.f32 %v420, 0.2
        %v439 = vmul.f32 %v421, 0.2
        %v440 = vsel %vm422, %v416, %v434
        %v441 = vsel %vm423, %v416, %v434
        %v442 = vsel %vm424, %v417, %v435
        %v443 = vsel %vm425, %v417, %v435
        %v444 = vsel %vm426, %v418, %v436
        %v445 = vsel %vm427, %v418, %v436
        %v446 = vsel %vm428, %v419, %v437
        %v447 = vsel %vm429, %v419, %v437
        %v448 = vsel %vm430, %v420, %v438
        %v449 = vsel %vm431, %v420, %v438
        %v450 = vsel %vm432, %v421, %v439
        %v451 = vsel %vm433, %v421, %v439
        %v452 = vmul.f32 %v362, %v440
        %v453 = vmul.f32 %v363, %v441
        %v454 = vmul.f32 %v364, %v442
        %v455 = vmul.f32 %v365, %v443
        %v456 = vmul.f32 %v366, %v444
        %v457 = vmul.f32 %v367, %v445
        %v458 = vmul.f32 %v368, %v446
        %v459 = vmul.f32 %v369, %v447
        %v460 = vmul.f32 %v370, %v448
        %v461 = vmul.f32 %v371, %v449
        %v462 = vmul.f32 %v372, %v450
        %v463 = vmul.f32 %v373, %v451
        %v464 = vld [vmem:[%s2] sm:$0xf]
        %v465 = vld [vmem:[%s2 + $0x4] sm:$0xf]
        %v466 = vpack.c.bf16 %v454, %v452
        %v467 = vpack.c.bf16 %v455, %v453
        %v468 = vpack.c.bf16 %v458, %v456
        %v469 = vpack.c.bf16 %v459, %v457
        %v470 = vpack.c.bf16 %v462, %v460
        %v471 = vpack.c.bf16 %v463, %v461
        %v472 = vld [vmem:[%s3] sm:$0xff]
        %v473 = vld [vmem:[%s3 + $0x8] sm:$0xff]
        %475 = vset.pattern.permute.xlu0 0
        %476 = vperm.xlu0 %475, %v472
        %v477 = vpop.permute.xlu0 %476
        %480 = vset.pattern.permute.xlu0 0
        %481 = vperm.xlu0 %480, %v473
        %v482 = vpop.permute.xlu0 %481
        %v486 = vunpack.c.l.b16 %v464
        %v487 = vunpack.c.l.b16 %v465
        %v488 = vpack.c.b16 %v487, %v486
        %vm489 = vcmask 392192
        %v491 = vsel %vm489, %v488, 0
        %493 = vmatprep.subr.bf16.mxu0 %v467
        %494 = vmatpush1.bf16.msra.mxu0 %v466
        %495 = vmatprep.subr.bf16.mxu0 %v469
        %496 = vmatpush1.bf16.msra.mxu0 %v468
        %497 = vmatprep.subr.bf16.mxu0 %v471
        %498 = vmatpush1.bf16.msra.mxu0 %v470
        %499 = vmatprep.subr.bf16.mxu0 0
        %500 = vmatpush1.bf16.msra.mxu0 0
        %501 = vmatprep.subr.bf16.mxu0 0
        %502 = vmatpush1.bf16.msra.mxu0 0
        %503 = vmatprep.subr.bf16.mxu0 0
        %504 = vmatpush1.bf16.msra.mxu0 0
        %505 = vmatprep.subr.bf16.mxu0 0
        %506 = vmatpush1.bf16.msra.mxu0 0
        %507 = vmatprep.subr.bf16.mxu0 0
        %508 = vmatpush1.bf16.msra.mxu0 0
        %509 = vmatprep.subr.bf16.mxu0 0
        %510 = vmatpush1.bf16.msra.mxu0 0
        %511 = vmatprep.subr.bf16.mxu0 0
        %512 = vmatpush1.bf16.msra.mxu0 0
        %513 = vmatprep.subr.bf16.mxu0 0
        %514 = vmatpush1.bf16.msra.mxu0 0
        %515 = vmatprep.subr.bf16.mxu0 0
        %516 = vmatpush1.bf16.msra.mxu0 0
        %517 = vmatprep.subr.bf16.mxu0 0
        %518 = vmatpush1.bf16.msra.mxu0 0
        %519 = vmatprep.subr.bf16.mxu0 0
        %520 = vmatpush1.bf16.msra.mxu0 0
        %521 = vmatprep.subr.bf16.mxu0 0
        %522 = vmatpush1.bf16.msra.mxu0 0
        %523 = vmatprep.subr.bf16.mxu0 0
        %524 = vmatpush1.bf16.msra.mxu0 0
        %525 = vmatprep.mubr.bf16.mxu0 0
        %526 = vmatmul.mubr.bf16.gmra.mrb[0].mxu0 %v491
        %v527 = vpop.f32.mrb[0].mxu0
        %v528 = vadd.f32 %v477, %v527
        %v529 = vpop.f32.mrb[0].mxu0
        %v530 = vadd.f32 %v477, %v529
        %v531 = vpop.f32.mrb[0].mxu0
        %v532 = vadd.f32 %v482, %v531
        %v533 = vpop.f32.mrb[0].mxu0
        %v534 = vadd.f32 %v482, %v533
        %535 = vdwg.mxu0
        %v536 = vadd.f32 %v528, %v530
        %537 = vadd.xlane.f32.xlu0 %v536
        %v538 = vpop.xlane.xlu0 %537
        %v539 = vadd.f32 %v532, %v534
        %540 = vadd.xlane.f32.xlu0 %v539
        %v541 = vpop.xlane.xlu0 %540
        %v542 = vmul.f32 %v538, %v355
        %v543 = vmul.f32 %v541, %v355
        %v544 = vsub.f32 %v528, %v542
        %v545 = vsub.f32 %v530, %v542
        %v546 = vsub.f32 %v532, %v543
        %v547 = vsub.f32 %v534, %v543
        %v548 = vmul.f32 %v544, %v544
        %v549 = vmul.f32 %v545, %v545
        %v550 = vmul.f32 %v546, %v546
        %v551 = vmul.f32 %v547, %v547
        %v552 = vadd.f32 %v548, %v549
        %553 = vadd.xlane.f32.xlu0 %v552
        %v554 = vpop.xlane.xlu0 %553
        %v555 = vadd.f32 %v550, %v551
        %556 = vadd.xlane.f32.xlu0 %v555
        %v557 = vpop.xlane.xlu0 %556
        %v558 = vmul.f32 %v554, %v355
        %v559 = vmul.f32 %v557, %v355
        %v560 = vadd.f32 %v558, 1e-05
        %v561 = vadd.f32 %v559, 1e-05
        %v562 = vrsqrt.pop %v560
        %v563 = vrsqrt.pop %v561
        %vm564 = vcmp.gt.f32.partialorder %v544, 0.0
        %vm565 = vcmp.gt.f32.partialorder %v545, 0.0
        %vm566 = vcmp.gt.f32.partialorder %v546, 0.0
        %vm567 = vcmp.gt.f32.partialorder %v547, 0.0
        %v568 = vmul.f32 %v562, 0.2
        %v569 = vmul.f32 %v563, 0.2
        %v570 = vsel %vm564, %v562, %v568
        %v571 = vsel %vm565, %v562, %v568
        %v572 = vsel %vm566, %v563, %v569
        %v573 = vsel %vm567, %v563, %v569
        %v574 = vmul.f32 %v544, %v570
        %v575 = vmul.f32 %v545, %v571
        %v576 = vmul.f32 %v546, %v572
        %v577 = vmul.f32 %v547, %v573
        %578 = vrot.lane.b32.xlu0 %v574, 36
        %v579 = vpop.permute.xlu0 %578
        %580 = vrot.lane.b32.xlu0 %v576, 36
        %v581 = vpop.permute.xlu0 %580
        %582 = vrot.lane.b32.xlu0 %v575, 36
        %v583 = vpop.permute.xlu0 %582
        %584 = vrot.lane.b32.xlu0 %v577, 36
        %v585 = vpop.permute.xlu0 %584
        %v586 = vlaneseq
        %v587 = vand.u32 %v586, 127
        %vm588 = vcmp.lt.s32.totalorder %v587, 36
        %v589 = vsel %vm588, %v579, %v583
        %v590 = vsel %vm588, %v581, %v585
        %v591 = vsel %vm588, %v583, %v579
        %v592 = vsel %vm588, %v585, %v581
        %v593 = vld [vmem:[%s1] ss:$8 sm:$0x3]
        %v595 = vlaneseq
        %v596 = vshrl.u32 %v595, 7
        %v597 = vsub.s32 0, %v596
        %v598 = vrot.slane %v593, %v597
        %v599 = vlaneseq
        %v600 = vshrl.u32 %v599, 7
        %v601 = vsub.s32 1, %v600
        %v602 = vrot.slane %v593, %v601
        %v605 = vmul.f32 %v591, %v598
        %v606 = vmul.f32 %v589, %v602
        %v607 = vmul.f32 %v592, %v598
        %v608 = vmul.f32 %v590, %v602
        %v609 = vpack.c.bf16 %v607, %v605
        %v610 = vpack.c.bf16 %v608, %v606
        %611 = vrot.lane.b32.xlu0 %v574, 32
        %v612 = vpop.permute.xlu0 %611
        %613 = vrot.lane.b32.xlu0 %v576, 32
        %v614 = vpop.permute.xlu0 %613
        %615 = vrot.lane.b32.xlu0 %v575, 32
        %v616 = vpop.permute.xlu0 %615
        %617 = vrot.lane.b32.xlu0 %v577, 32
        %v618 = vpop.permute.xlu0 %617
        %vm619 = vcmp.lt.s32.totalorder %v587, 32
        %v620 = vsel %vm619, %v612, %v616
        %v621 = vsel %vm619, %v614, %v618
        %v622 = vsel %vm619, %v616, %v612
        %v623 = vsel %vm619, %v618, %v614
        %s624 = scalar_lea.vmem %s1, 1
        %v625 = vld [vmem:[%s624] ss:$8 sm:$0x3]
        %v627 = vlaneseq
        %v628 = vshrl.u32 %v627, 7
        %v629 = vsub.s32 0, %v628
        %v630 = vrot.slane %v625, %v629
        %v631 = vlaneseq
        %v632 = vshrl.u32 %v631, 7
        %v633 = vsub.s32 1, %v632
        %v634 = vrot.slane %v625, %v633
        %v637 = vmul.f32 %v622, %v630
        %v638 = vmul.f32 %v620, %v634
        %v639 = vmul.f32 %v623, %v630
        %v640 = vmul.f32 %v621, %v634
        %v641 = vpack.c.bf16 %v639, %v637
        %v642 = vpack.c.bf16 %v640, %v638
        %643 = vrot.lane.b32.xlu0 %v574, 28
        %v644 = vpop.permute.xlu0 %643
        %645 = vrot.lane.b32.xlu0 %v576, 28
        %v646 = vpop.permute.xlu0 %645
        %647 = vrot.lane.b32.xlu0 %v575, 28
        %v648 = vpop.permute.xlu0 %647
        %649 = vrot.lane.b32.xlu0 %v577, 28
        %v650 = vpop.permute.xlu0 %649
        %vm651 = vcmp.lt.s32.totalorder %v587, 28
        %v652 = vsel %vm651, %v644, %v648
        %v653 = vsel %vm651, %v646, %v650
        %v654 = vsel %vm651, %v648, %v644
        %v655 = vsel %vm651, %v650, %v646
        %s656 = scalar_lea.vmem %s1, 2
        %v657 = vld [vmem:[%s656] ss:$8 sm:$0x3]
        %v659 = vlaneseq
        %v660 = vshrl.u32 %v659, 7
        %v661 = vsub.s32 0, %v660
        %v662 = vrot.slane %v657, %v661
        %v663 = vlaneseq
        %v664 = vshrl.u32 %v663, 7
        %v665 = vsub.s32 1, %v664
        %v666 = vrot.slane %v657, %v665
        %v669 = vmul.f32 %v654, %v662
        %v670 = vmul.f32 %v652, %v666
        %v671 = vmul.f32 %v655, %v662
        %v672 = vmul.f32 %v653, %v666
        %v673 = vpack.c.bf16 %v671, %v669
        %v674 = vpack.c.bf16 %v672, %v670
        %675 = vrot.lane.b32.xlu0 %v574, 4
        %v676 = vpop.permute.xlu0 %675
        %677 = vrot.lane.b32.xlu0 %v576, 4
        %v678 = vpop.permute.xlu0 %677
        %679 = vrot.lane.b32.xlu0 %v575, 4
        %v680 = vpop.permute.xlu0 %679
        %681 = vrot.lane.b32.xlu0 %v577, 4
        %v682 = vpop.permute.xlu0 %681
        %vm683 = vcmp.lt.s32.totalorder %v587, 4
        %v684 = vsel %vm683, %v676, %v680
        %v685 = vsel %vm683, %v678, %v682
        %v686 = vsel %vm683, %v680, %v676
        %v687 = vsel %vm683, %v682, %v678
        %s688 = scalar_lea.vmem %s1, 3
        %v689 = vld [vmem:[%s688] ss:$8 sm:$0x3]
        %v691 = vlaneseq
        %v692 = vshrl.u32 %v691, 7
        %v693 = vsub.s32 0, %v692
        %v694 = vrot.slane %v689, %v693
        %v695 = vlaneseq
        %v696 = vshrl.u32 %v695, 7
        %v697 = vsub.s32 1, %v696
        %v698 = vrot.slane %v689, %v697
        %v701 = vmul.f32 %v686, %v694
        %v702 = vmul.f32 %v684, %v698
        %v703 = vmul.f32 %v687, %v694
        %v704 = vmul.f32 %v685, %v698
        %v705 = vpack.c.bf16 %v703, %v701
        %v706 = vpack.c.bf16 %v704, %v702
        %v707 = vpack.c.bf16 %v576, %v574
        %v708 = vpack.c.bf16 %v577, %v575
        %709 = vrot.lane.b32.xlu0 %v574, 124
        %v710 = vpop.permute.xlu0 %709
        %711 = vrot.lane.b32.xlu0 %v576, 124
        %v712 = vpop.permute.xlu0 %711
        %713 = vrot.lane.b32.xlu0 %v575, 124
        %v714 = vpop.permute.xlu0 %713
        %715 = vrot.lane.b32.xlu0 %v577, 124
        %v716 = vpop.permute.xlu0 %715
        %vm717 = vcmp.lt.s32.totalorder %v587, 124
        %v718 = vsel %vm717, %v710, %v714
        %v719 = vsel %vm717, %v712, %v716
        %v720 = vsel %vm717, %v714, %v710
        %v721 = vsel %vm717, %v716, %v712
        %s722 = scalar_lea.vmem %s1, 5
        %v723 = vld [vmem:[%s722] ss:$8 sm:$0x3]
        %v725 = vlaneseq
        %v726 = vshrl.u32 %v725, 7
        %v727 = vsub.s32 0, %v726
        %v728 = vrot.slane %v723, %v727
        %v729 = vlaneseq
        %v730 = vshrl.u32 %v729, 7
        %v731 = vsub.s32 1, %v730
        %v732 = vrot.slane %v723, %v731
        %v735 = vmul.f32 %v718, %v728
        %v736 = vmul.f32 %v720, %v732
        %v737 = vmul.f32 %v719, %v728
        %v738 = vmul.f32 %v721, %v732
        %v739 = vpack.c.bf16 %v737, %v735
        %v740 = vpack.c.bf16 %v738, %v736
        %741 = vrot.lane.b32.xlu0 %v574, 100
        %v742 = vpop.permute.xlu0 %741
        %743 = vrot.lane.b32.xlu0 %v576, 100
        %v744 = vpop.permute.xlu0 %743
        %745 = vrot.lane.b32.xlu0 %v575, 100
        %v746 = vpop.permute.xlu0 %745
        %747 = vrot.lane.b32.xlu0 %v577, 100
        %v748 = vpop.permute.xlu0 %747
        %vm749 = vcmp.lt.s32.totalorder %v587, 100
        %v750 = vsel %vm749, %v742, %v746
        %v751 = vsel %vm749, %v744, %v748
        %v752 = vsel %vm749, %v746, %v742
        %v753 = vsel %vm749, %v748, %v744
        %s754 = scalar_lea.vmem %s1, 6
        %v755 = vld [vmem:[%s754] ss:$8 sm:$0x3]
        %v757 = vlaneseq
        %v758 = vshrl.u32 %v757, 7
        %v759 = vsub.s32 0, %v758
        %v760 = vrot.slane %v755, %v759
        %v761 = vlaneseq
        %v762 = vshrl.u32 %v761, 7
        %v763 = vsub.s32 1, %v762
        %v764 = vrot.slane %v755, %v763
        %v767 = vmul.f32 %v750, %v760
        %v768 = vmul.f32 %v752, %v764
        %v769 = vmul.f32 %v751, %v760
        %v770 = vmul.f32 %v753, %v764
        %v771 = vpack.c.bf16 %v769, %v767
        %v772 = vpack.c.bf16 %v770, %v768
        %773 = vrot.lane.b32.xlu0 %v574, 96
        %v774 = vpop.permute.xlu0 %773
        %775 = vrot.lane.b32.xlu0 %v576, 96
        %v776 = vpop.permute.xlu0 %775
        %777 = vrot.lane.b32.xlu0 %v575, 96
        %v778 = vpop.permute.xlu0 %777
        %779 = vrot.lane.b32.xlu0 %v577, 96
        %v780 = vpop.permute.xlu0 %779
        %vm781 = vcmp.lt.s32.totalorder %v587, 96
        %v782 = vsel %vm781, %v774, %v778
        %v783 = vsel %vm781, %v776, %v780
        %v784 = vsel %vm781, %v778, %v774
        %v785 = vsel %vm781, %v780, %v776
        %s786 = scalar_lea.vmem %s1, 7
        %v787 = vld [vmem:[%s786] ss:$8 sm:$0x3]
        %v789 = vlaneseq
        %v790 = vshrl.u32 %v789, 7
        %v791 = vsub.s32 0, %v790
        %v792 = vrot.slane %v787, %v791
        %v793 = vlaneseq
        %v794 = vshrl.u32 %v793, 7
        %v795 = vsub.s32 1, %v794
        %v796 = vrot.slane %v787, %v795
        %v799 = vmul.f32 %v782, %v792
        %v800 = vmul.f32 %v784, %v796
        %v801 = vmul.f32 %v783, %v792
        %v802 = vmul.f32 %v785, %v796
        %v803 = vpack.c.bf16 %v801, %v799
        %v804 = vpack.c.bf16 %v802, %v800
        %805 = vrot.lane.b32.xlu0 %v574, 92
        %v806 = vpop.permute.xlu0 %805
        %807 = vrot.lane.b32.xlu0 %v576, 92
        %v808 = vpop.permute.xlu0 %807
        %809 = vrot.lane.b32.xlu0 %v575, 92
        %v810 = vpop.permute.xlu0 %809
        %811 = vrot.lane.b32.xlu0 %v577, 92
        %v812 = vpop.permute.xlu0 %811
        %vm813 = vcmp.lt.s32.totalorder %v587, 92
        %v814 = vsel %vm813, %v806, %v810
        %v815 = vsel %vm813, %v808, %v812
        %v816 = vsel %vm813, %v810, %v806
        %v817 = vsel %vm813, %v812, %v808
        %s818 = scalar_lea.vmem %s1, 16
        %v819 = vld [vmem:[%s818] ss:$8 sm:$0x3]
        %v821 = vlaneseq
        %v822 = vshrl.u32 %v821, 7
        %v823 = vsub.s32 0, %v822
        %v824 = vrot.slane %v819, %v823
        %v825 = vlaneseq
        %v826 = vshrl.u32 %v825, 7
        %v827 = vsub.s32 1, %v826
        %v828 = vrot.slane %v819, %v827
        %v831 = vmul.f32 %v814, %v824
        %v832 = vmul.f32 %v816, %v828
        %v833 = vmul.f32 %v815, %v824
        %v834 = vmul.f32 %v817, %v828
        %v835 = vpack.c.bf16 %v833, %v831
        %v836 = vpack.c.bf16 %v834, %v832
        %v837 = vld [vmem:[%s4] sm:$0xff]
        %v838 = vld [vmem:[%s4 + $0x8] sm:$0xff]
        %v839 = vld [vmem:[%s5] sm:$0xff]
        %v840 = vld [vmem:[%s5 + $0x8] sm:$0xff]
        %842 = vset.pattern.permute.xlu0 0
        %843 = vperm.xlu0 %842, %v839
        %v844 = vpop.permute.xlu0 %843
        %847 = vset.pattern.permute.xlu0 0
        %848 = vperm.xlu0 %847, %v840
        %v849 = vpop.permute.xlu0 %848
        %v853 = vunpack.c.l.b16 %v837
        %v854 = vunpack.c.h.b16 %v837
        %v855 = vunpack.c.l.b16 %v838
        %v856 = vunpack.c.h.b16 %v838
        %v857 = vpack.c.b16 %v855, %v853
        %v858 = vpack.c.b16 %v856, %v854
        %vm860 = vcmask 130048
        %v862 = vsel %vm860, %v858, 0
        %864 = vmatprep.subr.bf16.mxu0 %v610
        %865 = vmatpush1.bf16.msra.mxu0 %v609
        %866 = vmatprep.subr.bf16.mxu0 %v642
        %867 = vmatpush1.bf16.msra.mxu0 %v641
        %868 = vmatprep.subr.bf16.mxu0 %v674
        %869 = vmatpush1.bf16.msra.mxu0 %v673
        %870 = vmatprep.subr.bf16.mxu0 %v706
        %871 = vmatpush1.bf16.msra.mxu0 %v705
        %872 = vmatprep.subr.bf16.mxu0 %v708
        %873 = vmatpush1.bf16.msra.mxu0 %v707
        %874 = vmatprep.subr.bf16.mxu0 %v740
        %875 = vmatpush1.bf16.msra.mxu0 %v739
        %876 = vmatprep.subr.bf16.mxu0 %v772
        %877 = vmatpush1.bf16.msra.mxu0 %v771
        %878 = vmatprep.subr.bf16.mxu0 %v804
        %879 = vmatpush1.bf16.msra.mxu0 %v803
        %880 = vmatprep.subr.bf16.mxu0 %v836
        %881 = vmatpush1.bf16.msra.mxu0 %v835
        %882 = vmatprep.subr.bf16.mxu0 0
        %883 = vmatpush1.bf16.msra.mxu0 0
        %884 = vmatprep.subr.bf16.mxu0 0
        %885 = vmatpush1.bf16.msra.mxu0 0
        %886 = vmatprep.subr.bf16.mxu0 0
        %887 = vmatpush1.bf16.msra.mxu0 0
        %888 = vmatprep.subr.bf16.mxu0 0
        %889 = vmatpush1.bf16.msra.mxu0 0
        %890 = vmatprep.subr.bf16.mxu0 0
        %891 = vmatpush1.bf16.msra.mxu0 0
        %892 = vmatprep.subr.bf16.mxu0 0
        %893 = vmatpush1.bf16.msra.mxu0 0
        %894 = vmatprep.subr.bf16.mxu0 0
        %895 = vmatpush1.bf16.msra.mxu0 0
        %896 = vmatprep.mubr.bf16.mxu0 %v862
        %897 = vmatmul.mubr.bf16.gmra.mrb[0].mxu0 %v857
        %v898 = vpop.f32.mrb[0].mxu0
        %v899 = vadd.f32 %v844, %v898
        %v900 = vpop.f32.mrb[0].mxu0
        %v901 = vadd.f32 %v844, %v900
        %v902 = vpop.f32.mrb[0].mxu0
        %v903 = vadd.f32 %v849, %v902
        %v904 = vpop.f32.mrb[0].mxu0
        %v905 = vadd.f32 %v849, %v904
        %906 = vdwg.mxu0
        %v907 = vadd.f32 %v899, %v901
        %908 = vadd.xlane.f32.xlu0 %v907
        %v909 = vpop.xlane.xlu0 %908
        %v910 = vadd.f32 %v903, %v905
        %911 = vadd.xlane.f32.xlu0 %v910
        %v912 = vpop.xlane.xlu0 %911
        %v913 = vmul.f32 %v909, %v355
        %v914 = vmul.f32 %v912, %v355
        %v915 = vsub.f32 %v899, %v913
        %v916 = vsub.f32 %v901, %v913
        %v917 = vsub.f32 %v903, %v914
        %v918 = vsub.f32 %v905, %v914
        %v919 = vmul.f32 %v915, %v915
        %v920 = vmul.f32 %v916, %v916
        %v921 = vmul.f32 %v917, %v917
        %v922 = vmul.f32 %v918, %v918
        %v923 = vadd.f32 %v919, %v920
        %924 = vadd.xlane.f32.xlu0 %v923
        %v925 = vpop.xlane.xlu0 %924
        %v926 = vadd.f32 %v921, %v922
        %927 = vadd.xlane.f32.xlu0 %v926
        %v928 = vpop.xlane.xlu0 %927
        %v929 = vmul.f32 %v925, %v355
        %v930 = vmul.f32 %v928, %v355
        %v931 = vadd.f32 %v929, 1e-05
        %v932 = vadd.f32 %v930, 1e-05
        %v933 = vrsqrt.pop %v931
        %v934 = vrsqrt.pop %v932
        %vm935 = vcmp.gt.f32.partialorder %v915, 0.0
        %vm936 = vcmp.gt.f32.partialorder %v916, 0.0
        %vm937 = vcmp.gt.f32.partialorder %v917, 0.0
        %vm938 = vcmp.gt.f32.partialorder %v918, 0.0
        %v939 = vmul.f32 %v933, 0.2
        %v940 = vmul.f32 %v934, 0.2
        %v941 = vsel %vm935, %v933, %v939
        %v942 = vsel %vm936, %v933, %v939
        %v943 = vsel %vm937, %v934, %v940
        %v944 = vsel %vm938, %v934, %v940
        %v945 = vmul.f32 %v915, %v941
        %v946 = vmul.f32 %v916, %v942
        %v947 = vmul.f32 %v917, %v943
        %v948 = vmul.f32 %v918, %v944
        %v949 = vld [vmem:[%s6] sm:$0xf]
        %v950 = vld [vmem:[%s6 + $0x4] sm:$0xf]
        %v951 = vpack.c.bf16 %v947, %v945
        %v952 = vpack.c.bf16 %v948, %v946
        %v953 = vld [vmem:[%s7] sm:$0xff]
        %v954 = vld [vmem:[%s7 + $0x8] sm:$0xff]
        %956 = vset.pattern.permute.xlu0 0
        %957 = vperm.xlu0 %956, %v953
        %v958 = vpop.permute.xlu0 %957
        %961 = vset.pattern.permute.xlu0 0
        %962 = vperm.xlu0 %961, %v954
        %v963 = vpop.permute.xlu0 %962
        %v967 = vunpack.c.l.b16 %v949
        %v968 = vunpack.c.l.b16 %v950
        %v969 = vpack.c.b16 %v968, %v967
        %v971 = vsel %vm860, %v969, 0
        %973 = vmatprep.subr.bf16.mxu0 %v952
        %974 = vmatpush1.bf16.msra.mxu0 %v951
        %975 = vmatprep.subr.bf16.mxu0 0
        %976 = vmatpush1.bf16.msra.mxu0 0
        %977 = vmatprep.subr.bf16.mxu0 0
        %978 = vmatpush1.bf16.msra.mxu0 0
        %979 = vmatprep.subr.bf16.mxu0 0
        %980 = vmatpush1.bf16.msra.mxu0 0
        %981 = vmatprep.subr.bf16.mxu0 0
        %982 = vmatpush1.bf16.msra.mxu0 0
        %983 = vmatprep.subr.bf16.mxu0 0
        %984 = vmatpush1.bf16.msra.mxu0 0
        %985 = vmatprep.subr.bf16.mxu0 0
        %986 = vmatpush1.bf16.msra.mxu0 0
        %987 = vmatprep.subr.bf16.mxu0 0
        %988 = vmatpush1.bf16.msra.mxu0 0
        %989 = vmatprep.subr.bf16.mxu0 0
        %990 = vmatpush1.bf16.msra.mxu0 0
        %991 = vmatprep.subr.bf16.mxu0 0
        %992 = vmatpush1.bf16.msra.mxu0 0
        %993 = vmatprep.subr.bf16.mxu0 0
        %994 = vmatpush1.bf16.msra.mxu0 0
        %995 = vmatprep.subr.bf16.mxu0 0
        %996 = vmatpush1.bf16.msra.mxu0 0
        %997 = vmatprep.subr.bf16.mxu0 0
        %998 = vmatpush1.bf16.msra.mxu0 0
        %999 = vmatprep.subr.bf16.mxu0 0
        %1000 = vmatpush1.bf16.msra.mxu0 0
        %1001 = vmatprep.subr.bf16.mxu0 0
        %1002 = vmatpush1.bf16.msra.mxu0 0
        %1003 = vmatprep.subr.bf16.mxu0 0
        %1004 = vmatpush1.bf16.msra.mxu0 0
        %1005 = vmatprep.mubr.bf16.mxu0 0
        %1006 = vmatmul.mubr.bf16.gmra.mrb[0].mxu0 %v971
        %v1007 = vpop.f32.mrb[0].mxu0
        %v1008 = vadd.f32 %v958, %v1007
        %v1009 = vpop.f32.mrb[0].mxu0
        %v1010 = vadd.f32 %v958, %v1009
        %v1011 = vpop.f32.mrb[0].mxu0
        %v1012 = vadd.f32 %v963, %v1011
        %v1013 = vpop.f32.mrb[0].mxu0
        %v1014 = vadd.f32 %v963, %v1013
        %1015 = vdwg.mxu0
        %1016 = vst [vmem:[%s323] sm:$0xff] %v1008
        %1017 = vst [vmem:[%s323 + $0x8] sm:$0xff] %v1010
        %1018 = vst [vmem:[%s323 + $0x10] sm:$0xff] %v1012
        %1019 = vst [vmem:[%s323 + $0x18] sm:$0xff] %v1014
        %s1020 = sand.u32 %s206, 1
        %s1021 = scalar_lea.sflag [#allocation4], %s1020
        %s1022 = sand.u32 %s206, 1
        %s1023 = smul.addr %s1022, 32
        %s1024 = scalar_lea.vmem [#allocation5], %s1023
        // Predicated region
        $region57: #{tpu_custom_call.1} parent=51 // pred_check
          %p1025 = pneg %p216
        $region58: #{tpu_custom_call.1} parent=51 // pred_check_branch
          %1027 = sbr.rel (%p1025) target = $region60
        $region59: #{tpu_custom_call.1} parent=51 // pred_region
          %s1029 = ssub.s32 512, 512
          %1030 = vsyncadd %s1021, %s1029
          %s1031 = smul.addr %s25, 4
          %s1032 = smul.addr %s1031, 128
          %s1033 = scalar_lea.hbm %s8, %s1032
          %s1034 = sshll.u32 %s1024, 4
          %s1035 = int_to_ptr.vmem [resolvable:$true] %s1034
          %1040 = dma.vmem_to_hbm [thread:$0]  %s1035, 512, %s1033, %s1021, 256, 256, 16
        $region60: #{tpu_custom_call.1} parent=51 // pred_fallthru
          _
      $region52: #{tpu_custom_call.1} parent=5 // pred_fallthru
        _
      %p1041 = scmp.le.s32.totalorder 2, %s20
      // Predicated region
      $region61: #{tpu_custom_call.1} parent=5 // pred_check
        %p1042 = pneg %p1041
      $region62: #{tpu_custom_call.1} parent=5 // pred_check_branch
        %1044 = sbr.rel (%p1042) target = $region64
      $region63: #{tpu_custom_call.1} parent=5 // pred_region
        %s1045 = ssub.s32 %s20, 2
        // Predicated region
        $region65: #{tpu_custom_call.1} parent=63 // pred_check
          %p1046 = pneg %p222
        $region66: #{tpu_custom_call.1} parent=63 // pred_check_branch
          %1048 = sbr.rel (%p1046) target = $region68
        $region67: #{tpu_custom_call.1} parent=63 // pred_region
          %s1049 = sand.u32 %s207, 1
          %s1050 = scalar_lea.sflag [#allocation4], %s1049
          %s1051 = sand.u32 %s207, 1
          %s1052 = smul.addr %s1051, 32
          %s1053 = scalar_lea.vmem [#allocation5], %s1052
          %1054 = dma.done %s1050, 512
        $region68: #{tpu_custom_call.1} parent=63 // pred_fallthru
          _
      $region64: #{tpu_custom_call.1} parent=5 // pred_fallthru
        _
    $region6: #{tpu_custom_call.1} parent=1 // loop_footer
      %s24 = sadd.s32 1, %s20
    $region7: #{tpu_custom_call.1} parent=1 // loop_footer_branch
      %19 = sbr.rel target = $region3
    $region8: #{tpu_custom_call.1} parent=1 // loop_exit
      _
    %1055 = vsyncpa [#allocation3], 1
    %s1056 = scalar_lea.sflag [#allocation3], 1
    %1057 = vsyncpa %s1056, 1
    %1058 = vsyncpa [#allocation4], 1
    %s1059 = scalar_lea.sflag [#allocation4], 1
    %1060 = vsyncpa %s1059, 1

</llo_original>
